<compile_context>
chip_gen: v7x
topology: tpu7x:2x2x1
jax: 0.10.0
libtpu: 0.0.40
codegen_flags: <defaults>
</compile_context>

<pallas_src>
import jax
import jax.numpy as jnp
from jax.experimental import pallas as pl
from jax.experimental.pallas import tpu as pltpu

HIDDEN = 16
HEAD_OUT = 3  # 1 (beta) + 2 (coords), fused into one head matmul


def simplenet_kernel(x_ref, w1_ref, b1_ref, wh_ref, bh_ref, out_ref):
    # x_ref: [F, TM] lane-dense batch tile (batch on the 128-lane axis).
    x_t = x_ref[...]

    # Hidden layer: h = relu(W1 @ x + b1)  -> [16, TM]   (MXU + VPU max)
    h = jnp.dot(w1_ref[...], x_t, preferred_element_type=jnp.float32) + b1_ref[...]
    h = jnp.maximum(h, 0.0)

    # Fused heads: one matmul for beta + coords -> [3, TM]
    z = jnp.dot(wh_ref[...], h, preferred_element_type=jnp.float32) + bh_ref[...]

    # Sigmoid (EUP) only on the beta row; coords rows pass through untouched.
    beta_row = jax.nn.sigmoid(z[0:1, :])
    out_ref[...] = jnp.concatenate([beta_row, z[1:HEAD_OUT, :]], axis=0)


def _vmem_capacity_bytes():
    try:
        info = pltpu.get_tpu_info()
        cap = getattr(info, "vmem_capacity_bytes", None)
        if cap:
            return int(cap)
    except Exception:
        pass
    return 64 << 20  # conservative fallback (v7x per-core VMEM)


def _live_bytes_per_lane_column(f):
    # f32 bytes live in VMEM per lane column: double-buffered x tile (f rows),
    # double-buffered out tile (3 rows, sublane-padded to 8), h (16 rows),
    # z (8 rows after sublane padding).
    return 4 * (2 * f + 2 * 8 + HIDDEN + 8)


def simplenet_forward(x, params, tm=None):
    """x: [N, input_dim] float32.  params: PyTorch nn.Linear layout ([out, in])."""
    n, f = x.shape
    w1, b1 = params["w1"], params["b1"]                          # [16,F], [16,1]
    wh = jnp.concatenate([params["wb"], params["wc"]], axis=0)   # [3,16]
    bh = jnp.concatenate([params["bb"], params["bc"]], axis=0)   # [3,1]

    vmem_cap = _vmem_capacity_bytes()
    per_col = _live_bytes_per_lane_column(f)

    if tm is None:
        # HBM/DMA bound: biggest lane tile that keeps the live working set
        # well inside VMEM (~40%), with a generation-aware cap.
        budget = int(vmem_cap * 0.4)
        cap = 131072 if vmem_cap <= (64 << 20) else 262144
        tm = min(cap, max(128, (budget // per_col) // 128 * 128))
    else:
        tm = 128 * pl.cdiv(int(tm), 128)  # keep lane-dense / (8,128)-legal

    if n <= tm:
        # Aim for >=2 grid steps when N allows so the "parallel" axis shards
        # across both TensorCores on v7x.
        tm = max(128, 128 * pl.cdiv(pl.cdiv(n, 2), 128))

    n_pad = tm * pl.cdiv(n, tm)
    n_tiles = n_pad // tm

    # Batch on the lane axis; single fused transpose+pad (no zeros+scatter).
    x_t = jnp.pad(x.T, ((0, 0), (0, n_pad - n)))

    vmem_limit = int(min(max(32 << 20, 2 * per_col * tm),
                         max(32 << 20, vmem_cap - (16 << 20))))

    out = pl.pallas_call(
        simplenet_kernel,
        out_shape=jax.ShapeDtypeStruct((HEAD_OUT, n_pad), jnp.float32),
        grid=(n_tiles,),
        in_specs=[
            pl.BlockSpec((f, tm), lambda i: (0, i)),             # x tile (lane-dense)
            pl.BlockSpec((HIDDEN, f), lambda i: (0, 0)),         # W1   (grid-invariant)
            pl.BlockSpec((HIDDEN, 1), lambda i: (0, 0)),         # b1
            pl.BlockSpec((HEAD_OUT, HIDDEN), lambda i: (0, 0)),  # fused head W
            pl.BlockSpec((HEAD_OUT, 1), lambda i: (0, 0)),       # fused head b
        ],
        out_specs=pl.BlockSpec((HEAD_OUT, tm), lambda i: (0, i)),
        compiler_params=pltpu.CompilerParams(
            dimension_semantics=("parallel",),
            vmem_limit_bytes=vmem_limit),
        cost_estimate=pl.CostEstimate(
            flops=2 * n_pad * (f * HIDDEN + HIDDEN * HEAD_OUT),
            transcendentals=n_pad,  # sigmoid on the beta row only
            bytes_accessed=4 * (n_pad * f + n_pad * HEAD_OUT
                                + HIDDEN * f + HIDDEN
                                + HEAD_OUT * HIDDEN + HEAD_OUT),
        ),
    )(x_t, w1, b1, wh, bh)

    beta = out[0:1, :n].T     # [N, 1]
    coords = out[1:3, :n].T   # [N, 2]
    return beta, coords


def init_params(input_dim, key):
    """PyTorch-Linear-like uniform init, stored in nn.Linear layout [out, in]."""
    ks = jax.random.split(key, 6)

    def lin(kw, kb, fan_in, fan_out):
        bound = 1.0 / (fan_in ** 0.5)
        w = jax.random.uniform(kw, (fan_out, fan_in), jnp.float32, -bound, bound)
        b = jax.random.uniform(kb, (fan_out, 1), jnp.float32, -bound, bound)
        return w, b

    w1, b1 = lin(ks[0], ks[1], input_dim, HIDDEN)
    wb, bb = lin(ks[2], ks[3], HIDDEN, 1)
    wc, bc = lin(ks[4], ks[5], HIDDEN, 2)
    return {"w1": w1, "b1": b1, "wb": wb, "bb": bb, "wc": wc, "bc": bc}


def reference_forward(x, p):
    h = jnp.maximum(x @ p["w1"].T + p["b1"].T, 0.0)
    beta = jax.nn.sigmoid(h @ p["wb"].T + p["bb"].T)
    coords = h @ p["wc"].T + p["bc"].T
    return beta, coords


if __name__ == "__main__":
    key = jax.random.PRNGKey(0)
    k_x, k_p, k_x2 = jax.random.split(key, 3)

    N, INPUT_DIM = 8, 4
    x = jax.random.normal(k_x, (N, INPUT_DIM), dtype=jnp.float32)
    params = init_params(INPUT_DIM, k_p)

    beta, coords = simplenet_forward(x, params)
    jax.block_until_ready((beta, coords))

    beta_ref, coords_ref = reference_forward(x, params)
    assert beta.shape == (N, 1) and coords.shape == (N, 2)
    assert jnp.allclose(beta, beta_ref, atol=1e-5, rtol=1e-5)
    assert jnp.allclose(coords, coords_ref, atol=1e-5, rtol=1e-5)

    # Exercise the multi-tile grid + padding path (N not a multiple of tm,
    # user-supplied non-default tile).
    N2 = 300
    x2 = jax.random.normal(k_x2, (N2, INPUT_DIM), dtype=jnp.float32)
    beta2, coords2 = simplenet_forward(x2, params, tm=128)
    jax.block_until_ready((beta2, coords2))
    beta2_ref, coords2_ref = reference_forward(x2, params)
    assert beta2.shape == (N2, 1) and coords2.shape == (N2, 2)
    assert jnp.allclose(beta2, beta2_ref, atol=1e-5, rtol=1e-5)
    assert jnp.allclose(coords2, coords2_ref, atol=1e-5, rtol=1e-5)

    print("KERNEL_OK")
</pallas_src>

<mosaic_0001>
module attributes {stable_mosaic.version = 11 : i64} {
  func.func @simplenet_kernel(%arg0: i32, %arg1: memref<4x128xf32, #tpu.memory_space<vmem>>, %arg2: memref<16x4xf32, #tpu.memory_space<vmem>>, %arg3: memref<16x1xf32, #tpu.memory_space<vmem>>, %arg4: memref<3x16xf32, #tpu.memory_space<vmem>>, %arg5: memref<3x1xf32, #tpu.memory_space<vmem>>, %arg6: memref<3x128xf32, #tpu.memory_space<vmem>>) attributes {dimension_semantics = [#tpu.dimension_semantics<parallel>], iteration_bounds = array<i64: 1>, scalar_prefetch = 0 : i64, scratch_operands = 0 : i64, tpu.core_type = #tpu.core_type<tc>, window_params = [{transform_indices = @transform_0, window_bounds = array<i64: 4, 128>}, {pipeline_mode = #tpu.pipeline_mode<synchronous>, transform_indices = @transform_1, window_bounds = array<i64: 16, 4>}, {pipeline_mode = #tpu.pipeline_mode<synchronous>, transform_indices = @transform_2, window_bounds = array<i64: 16, 1>}, {pipeline_mode = #tpu.pipeline_mode<synchronous>, transform_indices = @transform_3, window_bounds = array<i64: 3, 16>}, {pipeline_mode = #tpu.pipeline_mode<synchronous>, transform_indices = @transform_4, window_bounds = array<i64: 3, 1>}, {transform_indices = @transform_5, window_bounds = array<i64: 3, 128>}]} {
    %c0 = arith.constant 0 : index
    %c0_0 = arith.constant 0 : index
    %0 = vector.load %arg1[%c0, %c0_0] : memref<4x128xf32, #tpu.memory_space<vmem>>, vector<4x128xf32>
    %c0_1 = arith.constant 0 : index
    %c0_2 = arith.constant 0 : index
    %1 = vector.load %arg2[%c0_1, %c0_2] : memref<16x4xf32, #tpu.memory_space<vmem>>, vector<16x4xf32>
    %cst = arith.constant dense<0.000000e+00> : vector<16x128xf32>
    %2 = tpu.matmul %1, %0, %cst {dimension_numbers = #tpu.dot_dimension_numbers<[1], [0], [0], [1], [0, 0, 1, 1], [], []>} : vector<16x4xf32>, vector<4x128xf32>, vector<16x128xf32> -> vector<16x128xf32>
    %c0_3 = arith.constant 0 : index
    %c0_4 = arith.constant 0 : index
    %3 = vector.load %arg3[%c0_3, %c0_4] : memref<16x1xf32, #tpu.memory_space<vmem>>, vector<16x1xf32>
    %4 = vector.broadcast %3 : vector<16x1xf32> to vector<16x128xf32>
    %5 = arith.addf %2, %4 : vector<16x128xf32>
    %cst_5 = arith.constant 0.000000e+00 : f32
    %6 = vector.broadcast %cst_5 : f32 to vector<16x128xf32>
    %7 = arith.maximumf %5, %6 : vector<16x128xf32>
    %c0_6 = arith.constant 0 : index
    %c0_7 = arith.constant 0 : index
    %8 = vector.load %arg4[%c0_6, %c0_7] : memref<3x16xf32, #tpu.memory_space<vmem>>, vector<3x16xf32>
    %cst_8 = arith.constant dense<0.000000e+00> : vector<3x128xf32>
    %9 = tpu.matmul %8, %7, %cst_8 {dimension_numbers = #tpu.dot_dimension_numbers<[1], [0], [0], [1], [0, 0, 1, 1], [], []>} : vector<3x16xf32>, vector<16x128xf32>, vector<3x128xf32> -> vector<3x128xf32>
    %c0_9 = arith.constant 0 : index
    %c0_10 = arith.constant 0 : index
    %10 = vector.load %arg5[%c0_9, %c0_10] : memref<3x1xf32, #tpu.memory_space<vmem>>, vector<3x1xf32>
    %11 = vector.broadcast %10 : vector<3x1xf32> to vector<3x128xf32>
    %12 = arith.addf %9, %11 : vector<3x128xf32>
    %13 = vector.extract_strided_slice %12 {offsets = [0, 0], sizes = [1, 128], strides = [1, 1]} : vector<3x128xf32> to vector<1x128xf32>
    %14 = arith.negf %13 : vector<1x128xf32>
    %15 = math.exp %14 : vector<1x128xf32>
    %cst_11 = arith.constant 1.000000e+00 : f32
    %16 = vector.broadcast %cst_11 : f32 to vector<1x128xf32>
    %17 = arith.addf %16, %15 : vector<1x128xf32>
    %18 = arith.divf %16, %17 : vector<1x128xf32>
    %19 = vector.extract_strided_slice %12 {offsets = [1, 0], sizes = [2, 128], strides = [1, 1]} : vector<3x128xf32> to vector<2x128xf32>
    %20 = tpu.concatenate %18, %19 in 0 : vector<1x128xf32>, vector<2x128xf32> -> vector<3x128xf32>
    %c0_12 = arith.constant 0 : index
    %c0_13 = arith.constant 0 : index
    %21 = vector.load %arg6[%c0_12, %c0_13] : memref<3x128xf32, #tpu.memory_space<vmem>>, vector<3x128xf32>
    tpu.vector_store %arg6[%c0_12, %c0_13], %20 {strides = array<i32>} : memref<3x128xf32, #tpu.memory_space<vmem>>, vector<3x128xf32>,
    return
  }
  func.func @transform_0(%arg0: i32) -> (i32, i32) {
    %c0_i32 = arith.constant 0 : i32
    %c0_i32_0 = arith.constant 0 : i32
    return %c0_i32, %arg0 : i32, i32
  }
  func.func @transform_1(%arg0: i32) -> (i32, i32) {
    %c0_i32 = arith.constant 0 : i32
    %c0_i32_0 = arith.constant 0 : i32
    %c0_i32_1 = arith.constant 0 : i32
    return %c0_i32, %c0_i32_0 : i32, i32
  }
  func.func @transform_2(%arg0: i32) -> (i32, i32) {
    %c0_i32 = arith.constant 0 : i32
    %c0_i32_0 = arith.constant 0 : i32
    %c0_i32_1 = arith.constant 0 : i32
    return %c0_i32, %c0_i32_0 : i32, i32
  }
  func.func @transform_3(%arg0: i32) -> (i32, i32) {
    %c0_i32 = arith.constant 0 : i32
    %c0_i32_0 = arith.constant 0 : i32
    %c0_i32_1 = arith.constant 0 : i32
    return %c0_i32, %c0_i32_0 : i32, i32
  }
  func.func @transform_4(%arg0: i32) -> (i32, i32) {
    %c0_i32 = arith.constant 0 : i32
    %c0_i32_0 = arith.constant 0 : i32
    %c0_i32_1 = arith.constant 0 : i32
    return %c0_i32, %c0_i32_0 : i32, i32
  }
  func.func @transform_5(%arg0: i32) -> (i32, i32) {
    %c0_i32 = arith.constant 0 : i32
    %c0_i32_0 = arith.constant 0 : i32
    return %c0_i32, %arg0 : i32, i32
  }
}

</mosaic_0001>

<llo_original>
// kernel: tpu_custom_call.1
$region0: #{tpu_custom_call.1}
  #allocation0 [shape = 'u32[]', space=smem, size = 0x4, offset = 0x4, fixed_abs, tag = 'smem constant byte address 0x4 - core index']
  #allocation1 [shape = 'u32[144,128]{1,0:T(1,128)}', space=vmem, size = 0x12000, scoped, tag = 'internal scratch']
  %s0 = inlined_call_operand.vmem [shape: f32[4,128], index: 0, kind: input, shape index: {}]
  %s1 = inlined_call_operand.vmem [shape: f32[16,4], index: 1, kind: input, shape index: {}]
  %s2 = inlined_call_operand.vmem [shape: f32[16,1], index: 2, kind: input, shape index: {}]
  %s3 = inlined_call_operand.vmem [shape: f32[3,16], index: 3, kind: input, shape index: {}]
  %s4 = inlined_call_operand.vmem [shape: f32[3,1], index: 4, kind: input, shape index: {}]
  %s5 = inlined_call_operand.hbm [shape: f32[3,128], index: 5, kind: output, shape index: {}]
  %s6 = sld [smem:[#allocation0]]
  $region30: #{tpu_custom_call.1} parent=0
    _
  %s8 = ssub.s32 1, %s6
  %s9 = scalar_select 0, %s8, %s6
  $region1: #{tpu_custom_call.1} parent=0
    #allocation2 [shape = 'u8[2048]{0}', space=vmem, size = 0x800, scoped, tag = 'output window, operand 0, single buffered']
    #allocation3 [shape = 's32[1]{0}', space=sflag, size = 0x4, scoped, tag = 'scoped memory for tpu_custom_call.1']
    %10 = vsyncpa [#allocation3], 0
    // Predicated region
    $region2: #{tpu_custom_call.1} parent=1 // pred_check
      _
    $region3: #{tpu_custom_call.1} parent=1 // pred_check_branch
      %12 = sbr.rel (0) target = $region5
    $region4: #{tpu_custom_call.1} parent=1 // pred_region
      _
    $region5: #{tpu_custom_call.1} parent=1 // pred_fallthru
      _
    // Predicated region
    $region6: #{tpu_custom_call.1} parent=1 // pred_check
      _
    $region7: #{tpu_custom_call.1} parent=1 // pred_check_branch
      %14 = sbr.rel (0) target = $region9
    $region8: #{tpu_custom_call.1} parent=1 // pred_region
      _
    $region9: #{tpu_custom_call.1} parent=1 // pred_fallthru
      _
    // Predicated region
    $region10: #{tpu_custom_call.1} parent=1 // pred_check
      _
    $region11: #{tpu_custom_call.1} parent=1 // pred_check_branch
      %16 = sbr.rel (0) target = $region13
    $region12: #{tpu_custom_call.1} parent=1 // pred_region
      _
    $region13: #{tpu_custom_call.1} parent=1 // pred_fallthru
      _
    // Predicated region
    $region14: #{tpu_custom_call.1} parent=1 // pred_check
      _
    $region15: #{tpu_custom_call.1} parent=1 // pred_check_branch
      %18 = sbr.rel (0) target = $region17
    $region16: #{tpu_custom_call.1} parent=1 // pred_region
      _
    $region17: #{tpu_custom_call.1} parent=1 // pred_fallthru
      _
    // Predicated region
    $region18: #{tpu_custom_call.1} parent=1 // pred_check
      _
    $region19: #{tpu_custom_call.1} parent=1 // pred_check_branch
      %20 = sbr.rel (0) target = $region21
    $region20: #{tpu_custom_call.1} parent=1 // pred_region
      _
    $region21: #{tpu_custom_call.1} parent=1 // pred_fallthru
      _
    %v21 = vld [vmem:[%s0] sm:$0xf]
    %v22 = vld [vmem:[%s1] sm:$0xff]
    %v23 = vld [vmem:[%s1 + $0x8] sm:$0xff]
    %v24 = vld [vmem:[%s2] sm:$0xff]
    %v25 = vld [vmem:[%s2 + $0x8] sm:$0xff]
    %27 = vset.pattern.permute.xlu0 0
    %28 = vperm.xlu0 %27, %v24
    %v29 = vpop.permute.xlu0 %28
    %32 = vset.pattern.permute.xlu0 0
    %33 = vperm.xlu0 %32, %v25
    %v34 = vpop.permute.xlu0 %33
    %vm36 = vcmask 31744
    %v38 = vsel %vm36, %v22, 0
    %v41 = vsel %vm36, %v23, 0
    %vm43 = vcmask 1043456
    %v45 = vsel %vm43, %v21, 0
    %47 = vmatprep.subr.mxu0 0.0
    %48 = vmatpush1.msra.mxu0 %v45
    %49 = vmatprep.subr.mxu0 0.0
    %50 = vmatpush1.msra.mxu0 0.0
    %51 = vmatprep.subr.mxu0 0.0
    %52 = vmatpush1.msra.mxu0 0.0
    %53 = vmatprep.subr.mxu0 0.0
    %54 = vmatpush1.msra.mxu0 0.0
    %55 = vmatprep.subr.mxu0 0.0
    %56 = vmatpush1.msra.mxu0 0.0
    %57 = vmatprep.subr.mxu0 0.0
    %58 = vmatpush1.msra.mxu0 0.0
    %59 = vmatprep.subr.mxu0 0.0
    %60 = vmatpush1.msra.mxu0 0.0
    %61 = vmatprep.subr.mxu0 0.0
    %62 = vmatpush1.msra.mxu0 0.0
    %63 = vmatprep.subr.mxu0 0.0
    %64 = vmatpush1.msra.mxu0 0.0
    %65 = vmatprep.subr.mxu0 0.0
    %66 = vmatpush1.msra.mxu0 0.0
    %67 = vmatprep.subr.mxu0 0.0
    %68 = vmatpush1.msra.mxu0 0.0
    %69 = vmatprep.subr.mxu0 0.0
    %70 = vmatpush1.msra.mxu0 0.0
    %71 = vmatprep.subr.mxu0 0.0
    %72 = vmatpush1.msra.mxu0 0.0
    %73 = vmatprep.subr.mxu0 0.0
    %74 = vmatpush1.msra.mxu0 0.0
    %75 = vmatprep.subr.mxu0 0.0
    %76 = vmatpush1.msra.mxu0 0.0
    %77 = vmatprep.subr.mxu0 0.0
    %78 = vmatpush1.msra.mxu0 0.0
    %79 = vmatprep.subr.mxu0 0.0
    %80 = vmatpush1.msra.mxu0 0.0
    %81 = vmatprep.subr.mxu0 0.0
    %82 = vmatpush1.msra.mxu0 0.0
    %83 = vmatprep.subr.mxu0 0.0
    %84 = vmatpush1.msra.mxu0 0.0
    %85 = vmatprep.subr.mxu0 0.0
    %86 = vmatpush1.msra.mxu0 0.0
    %87 = vmatprep.subr.mxu0 0.0
    %88 = vmatpush1.msra.mxu0 0.0
    %89 = vmatprep.subr.mxu0 0.0
    %90 = vmatpush1.msra.mxu0 0.0
    %91 = vmatprep.subr.mxu0 0.0
    %92 = vmatpush1.msra.mxu0 0.0
    %93 = vmatprep.subr.mxu0 0.0
    %94 = vmatpush1.msra.mxu0 0.0
    %95 = vmatprep.subr.mxu0 0.0
    %96 = vmatpush1.msra.mxu0 0.0
    %97 = vmatprep.subr.mxu0 0.0
    %98 = vmatpush1.msra.mxu0 0.0
    %99 = vmatprep.subr.mxu0 0.0
    %100 = vmatpush1.msra.mxu0 0.0
    %101 = vmatprep.subr.mxu0 0.0
    %102 = vmatpush1.msra.mxu0 0.0
    %103 = vmatprep.subr.mxu0 0.0
    %104 = vmatpush1.msra.mxu0 0.0
    %105 = vmatprep.subr.mxu0 0.0
    %106 = vmatpush1.msra.mxu0 0.0
    %107 = vmatprep.subr.mxu0 0.0
    %108 = vmatpush1.msra.mxu0 0.0
    %109 = vmatprep.subr.mxu0 0.0
    %110 = vmatpush1.msra.mxu0 0.0
    %111 = vmatprep.mubr.f32.mxu0 0.0
    %112 = vmatmul.mubr.f32.gmra.mrb[0].mxu0 %v38
    %v113 = vpop.f32.mrb[0].mxu0
    %v114 = vadd.f32 %v29, %v113
    %v115 = vpop.f32.mrb[0].mxu0
    %116 = vmatprep.mubr.f32.mxu0 0.0
    %117 = vmatmul.mubr.f32.gmra.mrb[0].mxu0 %v41
    %v118 = vpop.f32.mrb[0].mxu0
    %v119 = vadd.f32 %v34, %v118
    %v120 = vpop.f32.mrb[0].mxu0
    %121 = vdwg.mxu0
    %v122 = vmax.f32 %v114, 0.0
    %v123 = vmax.f32 %v119, 0.0
    %v124 = vld [vmem:[%s3] sm:$0x7]
    %v125 = vld [vmem:[%s4] sm:$0x7]
    %127 = vset.pattern.permute.xlu0 0
    %128 = vperm.xlu0 %127, %v125
    %v129 = vpop.permute.xlu0 %128
    %vm131 = vcmask 130048
    %v133 = vsel %vm131, %v124, 0
    %135 = vmatprep.subr.mxu0 0.0
    %136 = vmatpush1.msra.mxu0 %v122
    %137 = vmatprep.subr.mxu0 0.0
    %138 = vmatpush1.msra.mxu0 %v123
    %139 = vmatprep.subr.mxu0 0.0
    %140 = vmatpush1.msra.mxu0 0.0
    %141 = vmatprep.subr.mxu0 0.0
    %142 = vmatpush1.msra.mxu0 0.0
    %143 = vmatprep.subr.mxu0 0.0
    %144 = vmatpush1.msra.mxu0 0.0
    %145 = vmatprep.subr.mxu0 0.0
    %146 = vmatpush1.msra.mxu0 0.0
    %147 = vmatprep.subr.mxu0 0.0
    %148 = vmatpush1.msra.mxu0 0.0
    %149 = vmatprep.subr.mxu0 0.0
    %150 = vmatpush1.msra.mxu0 0.0
    %151 = vmatprep.subr.mxu0 0.0
    %152 = vmatpush1.msra.mxu0 0.0
    %153 = vmatprep.subr.mxu0 0.0
    %154 = vmatpush1.msra.mxu0 0.0
    %155 = vmatprep.subr.mxu0 0.0
    %156 = vmatpush1.msra.mxu0 0.0
    %157 = vmatprep.subr.mxu0 0.0
    %158 = vmatpush1.msra.mxu0 0.0
    %159 = vmatprep.subr.mxu0 0.0
    %160 = vmatpush1.msra.mxu0 0.0
    %161 = vmatprep.subr.mxu0 0.0
    %162 = vmatpush1.msra.mxu0 0.0
    %163 = vmatprep.subr.mxu0 0.0
    %164 = vmatpush1.msra.mxu0 0.0
    %165 = vmatprep.subr.mxu0 0.0
    %166 = vmatpush1.msra.mxu0 0.0
    %167 = vmatprep.subr.mxu0 0.0
    %168 = vmatpush1.msra.mxu0 0.0
    %169 = vmatprep.subr.mxu0 0.0
    %170 = vmatpush1.msra.mxu0 0.0
    %171 = vmatprep.subr.mxu0 0.0
    %172 = vmatpush1.msra.mxu0 0.0
    %173 = vmatprep.subr.mxu0 0.0
    %174 = vmatpush1.msra.mxu0 0.0
    %175 = vmatprep.subr.mxu0 0.0
    %176 = vmatpush1.msra.mxu0 0.0
    %177 = vmatprep.subr.mxu0 0.0
    %178 = vmatpush1.msra.mxu0 0.0
    %179 = vmatprep.subr.mxu0 0.0
    %180 = vmatpush1.msra.mxu0 0.0
    %181 = vmatprep.subr.mxu0 0.0
    %182 = vmatpush1.msra.mxu0 0.0
    %183 = vmatprep.subr.mxu0 0.0
    %184 = vmatpush1.msra.mxu0 0.0
    %185 = vmatprep.subr.mxu0 0.0
    %186 = vmatpush1.msra.mxu0 0.0
    %187 = vmatprep.subr.mxu0 0.0
    %188 = vmatpush1.msra.mxu0 0.0
    %189 = vmatprep.subr.mxu0 0.0
    %190 = vmatpush1.msra.mxu0 0.0
    %191 = vmatprep.subr.mxu0 0.0
    %192 = vmatpush1.msra.mxu0 0.0
    %193 = vmatprep.subr.mxu0 0.0
    %194 = vmatpush1.msra.mxu0 0.0
    %195 = vmatprep.subr.mxu0 0.0
    %196 = vmatpush1.msra.mxu0 0.0
    %197 = vmatprep.subr.mxu0 0.0
    %198 = vmatpush1.msra.mxu0 0.0
    %199 = vmatprep.mubr.f32.mxu0 0.0
    %200 = vmatmul.mubr.f32.gmra.mrb[0].mxu0 %v133
    %v201 = vpop.f32.mrb[0].mxu0
    %v202 = vadd.f32 %v129, %v201
    %v203 = vpop.f32.mrb[0].mxu0
    %204 = vdwg.mxu0
    %v205 = vxor.u32 %v202, 2147483648
    %v206 = vmul.f32 %v205, 1.442695
    %v207 = vpow.pop %v206
    %v208 = vadd.f32 %v207, 1.0
    %v209 = vrcp.pop %v208
    %v210 = vmul.f32 1.0, %v209
    %vm211 = vcmask 1040384
    %v212 = vsel %vm211, %v210, %v202
    %213 = vst [vmem:[#allocation2] sm:$0x7] %v212
    // Predicated region
    $region22: #{tpu_custom_call.1} parent=1 // pred_check
      _
    $region23: #{tpu_custom_call.1} parent=1 // pred_check_branch
      %215 = sbr.rel (0) target = $region25
    $region24: #{tpu_custom_call.1} parent=1 // pred_region
      %s217 = ssub.s32 64, 64
      %218 = vsyncadd [#allocation3], %s217
      %s220 = sshll.u32 [#allocation2], 4
      %s221 = int_to_ptr.vmem [resolvable:$true] %s220
      %223 = dma.vmem_to_hbm [thread:$0]  %s221, 64, %s5, [#allocation3]
    $region25: #{tpu_custom_call.1} parent=1 // pred_fallthru
      _
    // Predicated region
    $region26: #{tpu_custom_call.1} parent=1 // pred_check
      _
    $region27: #{tpu_custom_call.1} parent=1 // pred_check_branch
      %225 = sbr.rel (0) target = $region29
    $region28: #{tpu_custom_call.1} parent=1 // pred_region
      %226 = dma.done [#allocation3], 64
    $region29: #{tpu_custom_call.1} parent=1 // pred_fallthru
      _
    %227 = vsyncpa [#allocation3], 1

</llo_original>
